<compile_context>
chip_gen: v5e
topology: v5e:2x2
jax: 0.10.0
libtpu: 0.0.40
codegen_flags: <defaults>
</compile_context>

<pallas_src>
import functools

import jax
import jax.numpy as jnp
from jax import lax
from jax.experimental import pallas as pl
from jax.experimental.pallas import tpu as pltpu


def _sigmoid(v):
    # 1 / (1 + exp(-v)); exp + approximate reciprocal both run on the EUP.
    return pl.reciprocal(1.0 + jnp.exp(-v), approx=True)


def cbam_kernel(x_ref, w1_ref, w2_ref, wmask_ref, o_ref, planes_ref, sa_ref,
                *, H, W, k, HW_pad, hw_chunk):
    """One batch element per grid step.

    x_ref     : (1, C, HW_pad)     VMEM  bf16
    w1_ref    : (Cmid, C)          VMEM  bf16   (first 1x1 conv weights)
    w2_ref    : (C, Cmid)          VMEM  bf16   (second 1x1 conv weights)
    wmask_ref : (k*k, 2, HW_pad)   VMEM  f32    (per-tap weighted boundary masks)
    o_ref     : (1, C, HW_pad)     VMEM  f32 (or bf16)
    planes_ref: (2, HW_pad)        VMEM  f32    scratch ([ch_max; ch_avg])
    sa_ref    : (1, HW_pad)        VMEM  f32    scratch (spatial attention)
    """
    HW = H * W
    C = x_ref.shape[1]
    p = (k - 1) // 2
    num_chunks = HW_pad // hw_chunk
    small = num_chunks <= 8

    w1 = w1_ref[...]                      # (Cmid, C) bf16
    w2 = w2_ref[...]                      # (C, Cmid) bf16

    # ---- pass 1: channel attention, running (C,1) max / sum over HW chunks --
    def ca_body(i, carry):
        y_max, y_sum = carry
        c0 = pl.multiple_of(i * hw_chunk, 128)
        xc = x_ref[0, :, pl.ds(c0, hw_chunk)]                          # bf16
        hc = jnp.maximum(
            jnp.dot(w1, xc, preferred_element_type=jnp.float32), 0.0)  # f32
        yc = jnp.dot(w2, hc.astype(jnp.bfloat16),
                     preferred_element_type=jnp.float32)               # (C, chunk)
        if HW_pad > HW:
            # Padded x columns give yc == 0 exactly (sum unaffected); exclude
            # them from the max so they cannot dominate all-negative rows.
            lane = lax.broadcasted_iota(jnp.int32, yc.shape, 1)
            yc_for_max = jnp.where(i * hw_chunk + lane < HW, yc, -jnp.inf)
        else:
            yc_for_max = yc
        y_max = jnp.maximum(y_max, jnp.max(yc_for_max, axis=1, keepdims=True))
        y_sum = y_sum + jnp.sum(yc, axis=1, keepdims=True)
        return y_max, y_sum

    y_max, y_sum = lax.fori_loop(
        0, num_chunks, ca_body,
        (jnp.full((C, 1), -jnp.inf, jnp.float32),
         jnp.zeros((C, 1), jnp.float32)),
        unroll=small)

    ca = _sigmoid(y_max + y_sum * (1.0 / HW))                          # (C, 1)
    ca_b = jnp.broadcast_to(ca, (C, hw_chunk))   # hoisted: not rebuilt per chunk

    # ---- pass 2: x1 = ca*x -> o_ref; channel max / mean -> planes scratch ---
    @pl.loop(0, num_chunks, unroll=small)
    def _(i):
        c0 = pl.multiple_of(i * hw_chunk, 128)
        xc = x_ref[0, :, pl.ds(c0, hw_chunk)].astype(jnp.float32)
        x1c = ca_b * xc                                                # (C, chunk)
        o_ref[0, :, pl.ds(c0, hw_chunk)] = x1c.astype(o_ref.dtype)
        cmax = jnp.max(x1c, axis=0, keepdims=True)                     # (1, chunk)
        cavg = jnp.sum(x1c, axis=0, keepdims=True) * (1.0 / C)         # (1, chunk)
        planes_ref[:, pl.ds(c0, hw_chunk)] = jnp.concatenate([cmax, cavg], 0)

    # ---- pass 3: spatial k x k conv via XLU rolls + precomputed masks -------
    planes = planes_ref[...]                                           # (2, HW_pad)
    acc = jnp.zeros((2, HW_pad), jnp.float32)
    for dh in range(k):
        for dw in range(k):
            t = dh * k + dw
            off = (dh - p) * W + (dw - p)          # flattened tap offset
            shift = (-off) % HW_pad                # out[s] sees in[s + off]
            rolled = planes if shift == 0 else pltpu.roll(planes, shift, axis=1)
            acc = acc + rolled * wmask_ref[t]      # mask kills wrap/pad leakage
    sa_ref[...] = _sigmoid(jnp.sum(acc, axis=0, keepdims=True))        # (1, HW_pad)

    # ---- pass 4: epilogue, o = x1 * sa, chunk by chunk ----------------------
    @pl.loop(0, num_chunks, unroll=small)
    def _(i):
        c0 = pl.multiple_of(i * hw_chunk, 128)
        x1c = o_ref[0, :, pl.ds(c0, hw_chunk)].astype(jnp.float32)
        sac = sa_ref[:, pl.ds(c0, hw_chunk)]
        o_ref[0, :, pl.ds(c0, hw_chunk)] = (x1c * sac).astype(o_ref.dtype)


def _spatial_masks(wsa, H, W, k, HW_pad):
    """Host-side per-tap weighted boundary masks: (k*k, 2, HW_pad) float32.

    wmask[t, c, s] = wsa[0, c, dh, dw] * 1[tap (dh,dw) at flat position s is
    inside the image]; zero for padded columns s >= H*W.
    """
    p = (k - 1) // 2
    s = jnp.arange(HW_pad, dtype=jnp.int32)
    row = s // W
    col = s % W
    in_img = s < (H * W)
    taps = []
    for dh in range(k):
        for dw in range(k):
            r = row + (dh - p)
            c = col + (dw - p)
            valid = in_img & (r >= 0) & (r < H) & (c >= 0) & (c < W)
            mf = valid.astype(jnp.float32)                             # (HW_pad,)
            taps.append(jnp.stack([wsa[0, 0, dh, dw] * mf,
                                   wsa[0, 1, dh, dw] * mf], axis=0))   # (2, HW_pad)
    return jnp.stack(taps, axis=0)                                     # (k*k, 2, HW_pad)


def _pick_hw_chunk(HW_pad, desired):
    """Largest multiple of 128 that divides HW_pad and is <= desired."""
    if HW_pad <= desired:
        return HW_pad
    m = HW_pad // 128
    best = 1
    for d in range(1, m + 1):
        if m % d == 0 and 128 * d <= desired:
            best = d
    return 128 * best


def _vmem_limit_and_desired_chunk():
    """Per-generation VMEM limit (with headroom) and target chunk width."""
    try:
        cap = int(pltpu.get_tpu_info().vmem_capacity_bytes)
    except Exception:
        cap = 64 * 1024 * 1024          # conservative fallback (v7x per-TC)
    limit = max(32 * 1024 * 1024, min(int(cap * 0.8), cap - 8 * 1024 * 1024))
    desired = 2048 if cap >= 100 * 1024 * 1024 else 1024
    return limit, desired


def cbam_forward(x, w1, w2, wsa, k, *, hw_chunk=None, out_dtype=jnp.float32):
    """x: (B, C, H, W) float32 (NCHW, like PyTorch). Returns (B, C, H, W).

    x / w1 / w2 are cast to bf16 for HBM traffic and the MXU matmuls; all
    element-wise math stays float32.  out_dtype=bf16 halves the write traffic
    if the consumer tolerates it (default f32 matches the PyTorch module).
    """
    assert k % 2 == 1, "spatial conv assumes odd kernel (PyTorch same-padding)"
    B, C, H, W = x.shape
    Cmid = w1.shape[0]
    HW = H * W
    HW_pad = ((HW + 127) // 128) * 128            # lane-dense loads/stores

    vmem_limit, desired_chunk = _vmem_limit_and_desired_chunk()
    if hw_chunk is None:
        hw_chunk = _pick_hw_chunk(HW_pad, desired_chunk)

    xf = x.reshape(B, C, HW).astype(jnp.bfloat16)
    if HW_pad != HW:
        xf = jnp.pad(xf, ((0, 0), (0, 0), (0, HW_pad - HW)))

    wmask = _spatial_masks(wsa.astype(jnp.float32), H, W, k, HW_pad)

    kernel = functools.partial(cbam_kernel, H=H, W=W, k=k,
                               HW_pad=HW_pad, hw_chunk=hw_chunk)
    out = pl.pallas_call(
        kernel,
        out_shape=jax.ShapeDtypeStruct((B, C, HW_pad), out_dtype),
        grid_spec=pltpu.PrefetchScalarGridSpec(
            num_scalar_prefetch=0,
            grid=(B,),
            in_specs=[
                pl.BlockSpec((1, C, HW_pad), lambda b: (b, 0, 0)),
                pl.BlockSpec((Cmid, C), lambda b: (0, 0)),
                pl.BlockSpec((C, Cmid), lambda b: (0, 0)),
                pl.BlockSpec((k * k, 2, HW_pad), lambda b: (0, 0, 0)),
            ],
            out_specs=pl.BlockSpec((1, C, HW_pad), lambda b: (b, 0, 0)),
            scratch_shapes=[
                pltpu.VMEM((2, HW_pad), jnp.float32),   # [ch_max; ch_avg]
                pltpu.VMEM((1, HW_pad), jnp.float32),   # spatial attention
            ]),
        compiler_params=pltpu.CompilerParams(
            dimension_semantics=("parallel",),
            vmem_limit_bytes=vmem_limit),
    )(xf, w1.astype(jnp.bfloat16), w2.astype(jnp.bfloat16), wmask)

    return out[:, :, :HW].reshape(B, C, H, W)


def cbam_reference(x, w1, w2, wsa, k):
    """Pure-JAX reference matching the PyTorch forward pass."""
    B, C, H, W = x.shape
    p = (k - 1) // 2
    xf = x.reshape(B, C, H * W)
    h = jnp.maximum(jnp.einsum('mc,bcs->bms', w1, xf), 0.0)
    y = jnp.einsum('cm,bms->bcs', w2, h)
    ca = jax.nn.sigmoid(y.max(-1, keepdims=True) + y.mean(-1, keepdims=True))
    x1 = (ca * xf).reshape(B, C, H, W)
    ch_max = x1.max(axis=1, keepdims=True)
    ch_avg = x1.mean(axis=1, keepdims=True)
    att_in = jnp.concatenate([ch_max, ch_avg], axis=1)                # (B, 2, H, W)
    sa = lax.conv_general_dilated(att_in, wsa, window_strides=(1, 1),
                                  padding=[(p, p), (p, p)],
                                  dimension_numbers=('NCHW', 'OIHW', 'NCHW'))
    return x1 * jax.nn.sigmoid(sa)


if __name__ == "__main__":
    B, C, H, W = 2, 4, 16, 16
    radio = 2
    k = 3
    Cmid = C // radio

    key = jax.random.PRNGKey(0)
    kx, k1, k2, k3 = jax.random.split(key, 4)
    x = jax.random.normal(kx, (B, C, H, W), jnp.float32)
    # Conv2d(C, Cmid, 1, bias=False).weight -> (Cmid, C, 1, 1); keep (Cmid, C)
    w1 = 0.5 * jax.random.normal(k1, (Cmid, C), jnp.float32)
    # Conv2d(Cmid, C, 1, bias=False).weight -> (C, Cmid, 1, 1); keep (C, Cmid)
    w2 = 0.5 * jax.random.normal(k2, (C, Cmid), jnp.float32)
    # Conv2d(2, 1, k, padding=(k-1)//2, bias=False).weight -> (1, 2, k, k)
    wsa = 0.3 * jax.random.normal(k3, (1, 2, k, k), jnp.float32)

    out = cbam_forward(x, w1, w2, wsa, k)
    out = jax.block_until_ready(out)

    # Reference is evaluated on the same bf16-rounded x / w1 / w2 the kernel
    # consumes, so the check isolates kernel math from the intentional bf16
    # I/O quantization (tolerance covers the bf16 h-recast + approx sigmoid).
    rd = lambda a: a.astype(jnp.bfloat16).astype(jnp.float32)
    ref = cbam_reference(rd(x), rd(w1), rd(w2), wsa, k)
    assert out.shape == (B, C, H, W)
    if not jnp.allclose(out, ref, atol=3e-2, rtol=3e-2):
        raise AssertionError("Pallas CBAM output does not match JAX reference")

    print("KERNEL_OK")
</pallas_src>

<mosaic_0001>
module attributes {stable_mosaic.version = 11 : i64} {
  func.func @cbam_kernel(%arg0: i32, %arg1: memref<1x4x256xbf16, #tpu.memory_space<vmem>>, %arg2: memref<2x4xbf16, #tpu.memory_space<vmem>>, %arg3: memref<4x2xbf16, #tpu.memory_space<vmem>>, %arg4: memref<9x2x256xf32, #tpu.memory_space<vmem>>, %arg5: memref<1x4x256xf32, #tpu.memory_space<vmem>>, %arg6: memref<2x256xf32, #tpu.memory_space<vmem>>, %arg7: memref<1x256xf32, #tpu.memory_space<vmem>>) attributes {dimension_semantics = [#tpu.dimension_semantics<parallel>], iteration_bounds = array<i64: 2>, scalar_prefetch = 0 : i64, scratch_operands = 2 : i64, tpu.core_type = #tpu.core_type<tc>, window_params = [{transform_indices = @transform_0, window_bounds = array<i64: 1, 4, 256>}, {pipeline_mode = #tpu.pipeline_mode<synchronous>, transform_indices = @transform_1, window_bounds = array<i64: 2, 4>}, {pipeline_mode = #tpu.pipeline_mode<synchronous>, transform_indices = @transform_2, window_bounds = array<i64: 4, 2>}, {pipeline_mode = #tpu.pipeline_mode<synchronous>, transform_indices = @transform_3, window_bounds = array<i64: 9, 2, 256>}, {transform_indices = @transform_4, window_bounds = array<i64: 1, 4, 256>}]} {
    %c0 = arith.constant 0 : index
    %c0_0 = arith.constant 0 : index
    %0 = vector.load %arg2[%c0, %c0_0] : memref<2x4xbf16, #tpu.memory_space<vmem>>, vector<2x4xbf16>
    %c0_1 = arith.constant 0 : index
    %c0_2 = arith.constant 0 : index
    %1 = vector.load %arg3[%c0_1, %c0_2] : memref<4x2xbf16, #tpu.memory_space<vmem>>, vector<4x2xbf16>
    %cst = arith.constant 0xFF800000 : f32
    %2 = vector.broadcast %cst : f32 to vector<4x1xf32>
    %cst_3 = arith.constant 0.000000e+00 : f32
    %3 = vector.broadcast %cst_3 : f32 to vector<4x1xf32>
    %c0_i32 = arith.constant 0 : i32
    %c256_i32 = arith.constant 256 : i32
    %4 = arith.muli %c0_i32, %c256_i32 : i32
    %5 = tpu.assume_multiple %4, 128 : i32
    %c0_4 = arith.constant 0 : index
    %c0_5 = arith.constant 0 : index
    %6 = arith.index_cast %5 : i32 to index
    %7 = vector.load %arg1[%c0_4, %c0_5, %6] : memref<1x4x256xbf16, #tpu.memory_space<vmem>>, vector<1x4x256xbf16>
    %8 = vector.shape_cast %7 : vector<1x4x256xbf16> to vector<4x256xbf16>
    %cst_6 = arith.constant dense<0.000000e+00> : vector<2x256xf32>
    %9 = tpu.matmul %0, %8, %cst_6 {dimension_numbers = #tpu.dot_dimension_numbers<[1], [0], [0], [1], [0, 0, 1, 1], [], []>} : vector<2x4xbf16>, vector<4x256xbf16>, vector<2x256xf32> -> vector<2x256xf32>
    %cst_7 = arith.constant 0.000000e+00 : f32
    %10 = vector.broadcast %cst_7 : f32 to vector<2x256xf32>
    %11 = arith.maximumf %9, %10 : vector<2x256xf32>
    %12 = arith.truncf %11 : vector<2x256xf32> to vector<2x256xbf16>
    %cst_8 = arith.constant dense<0.000000e+00> : vector<4x256xf32>
    %13 = tpu.matmul %1, %12, %cst_8 {dimension_numbers = #tpu.dot_dimension_numbers<[1], [0], [0], [1], [0, 0, 1, 1], [], []>} : vector<4x2xbf16>, vector<2x256xbf16>, vector<4x256xf32> -> vector<4x256xf32>
    %cst_9 = arith.constant dense<0xFF800000> : vector<4xf32>
    %14 = vector.multi_reduction <maximumf>, %13, %cst_9 [1] : vector<4x256xf32> to vector<4xf32>
    %15 = vector.shape_cast %14 : vector<4xf32> to vector<4x1xf32>
    %16 = arith.maximumf %2, %15 : vector<4x1xf32>
    %cst_10 = arith.constant dense<0.000000e+00> : vector<4xf32>
    %17 = vector.multi_reduction <add>, %13, %cst_10 [1] : vector<4x256xf32> to vector<4xf32>
    %18 = vector.shape_cast %17 : vector<4xf32> to vector<4x1xf32>
    %19 = arith.addf %3, %18 : vector<4x1xf32>
    %c1_i32 = arith.constant 1 : i32
    %cst_11 = arith.constant 3.906250e-03 : f32
    %20 = vector.broadcast %cst_11 : f32 to vector<4x1xf32>
    %21 = arith.mulf %19, %20 : vector<4x1xf32>
    %22 = arith.addf %16, %21 : vector<4x1xf32>
    %cst_12 = arith.constant 0.000000e+00 : f32
    %23 = vector.broadcast %cst_12 : f32 to vector<4x1xf32>
    %24 = arith.subf %23, %22 : vector<4x1xf32>
    %25 = math.exp %24 : vector<4x1xf32>
    %cst_13 = arith.constant 1.000000e+00 : f32
    %26 = vector.broadcast %cst_13 : f32 to vector<4x1xf32>
    %27 = arith.addf %26, %25 : vector<4x1xf32>
    %28 = tpu.reciprocal %27 {approx = true} : vector<4x1xf32> -> vector<4x1xf32>
    %29 = vector.shape_cast %28 : vector<4x1xf32> to vector<4x1xf32>
    %30 = vector.broadcast %29 : vector<4x1xf32> to vector<4x256xf32>
    %c0_i32_14 = arith.constant 0 : i32
    %c1_i32_15 = arith.constant 1 : i32
    %31 = arith.muli %c0_i32_14, %c1_i32_15 : i32
    %c0_i32_16 = arith.constant 0 : i32
    %32 = arith.addi %c0_i32_16, %31 : i32
    %c256_i32_17 = arith.constant 256 : i32
    %33 = arith.muli %32, %c256_i32_17 : i32
    %34 = tpu.assume_multiple %33, 128 : i32
    %c0_18 = arith.constant 0 : index
    %c0_19 = arith.constant 0 : index
    %35 = arith.index_cast %34 : i32 to index
    %36 = vector.load %arg1[%c0_18, %c0_19, %35] : memref<1x4x256xbf16, #tpu.memory_space<vmem>>, vector<1x4x256xbf16>
    %37 = vector.shape_cast %36 : vector<1x4x256xbf16> to vector<4x256xbf16>
    %38 = arith.extf %37 : vector<4x256xbf16> to vector<4x256xf32>
    %39 = arith.mulf %30, %38 : vector<4x256xf32>
    %c0_20 = arith.constant 0 : index
    %c0_21 = arith.constant 0 : index
    %40 = arith.index_cast %34 : i32 to index
    %41 = vector.load %arg5[%c0_20, %c0_21, %40] : memref<1x4x256xf32, #tpu.memory_space<vmem>>, vector<1x4x256xf32>
    %42 = vector.shape_cast %41 : vector<1x4x256xf32> to vector<4x256xf32>
    %43 = vector.shape_cast %39 : vector<4x256xf32> to vector<1x4x256xf32>
    tpu.vector_store %arg5[%c0_20, %c0_21, %40], %43 {strides = array<i32>} : memref<1x4x256xf32, #tpu.memory_space<vmem>>, vector<1x4x256xf32>,
    %cst_22 = arith.constant dense<0xFF800000> : vector<256xf32>
    %44 = vector.multi_reduction <maximumf>, %39, %cst_22 [0] : vector<4x256xf32> to vector<256xf32>
    %45 = vector.shape_cast %44 : vector<256xf32> to vector<1x256xf32>
    %cst_23 = arith.constant dense<0.000000e+00> : vector<256xf32>
    %46 = vector.multi_reduction <add>, %39, %cst_23 [0] : vector<4x256xf32> to vector<256xf32>
    %47 = vector.shape_cast %46 : vector<256xf32> to vector<1x256xf32>
    %cst_24 = arith.constant 2.500000e-01 : f32
    %48 = vector.broadcast %cst_24 : f32 to vector<1x256xf32>
    %49 = arith.mulf %47, %48 : vector<1x256xf32>
    %50 = tpu.concatenate %45, %49 in 0 : vector<1x256xf32>, vector<1x256xf32> -> vector<2x256xf32>
    %c0_25 = arith.constant 0 : index
    %51 = arith.index_cast %34 : i32 to index
    %52 = vector.load %arg6[%c0_25, %51] : memref<2x256xf32, #tpu.memory_space<vmem>>, vector<2x256xf32>
    tpu.vector_store %arg6[%c0_25, %51], %50 {strides = array<i32>} : memref<2x256xf32, #tpu.memory_space<vmem>>, vector<2x256xf32>,
    %c1_i32_26 = arith.constant 1 : i32
    %c0_27 = arith.constant 0 : index
    %c0_28 = arith.constant 0 : index
    %53 = vector.load %arg6[%c0_27, %c0_28] : memref<2x256xf32, #tpu.memory_space<vmem>>, vector<2x256xf32>
    %cst_29 = arith.constant 0.000000e+00 : f32
    %54 = vector.broadcast %cst_29 : f32 to vector<2x256xf32>
    %c17_i32 = arith.constant 17 : i32
    %55 = tpu.dynamic_rotate %53 by %c17_i32 dim 1 : vector<2x256xf32>, i32 -> vector<2x256xf32>
    %c0_30 = arith.constant 0 : index
    %c0_31 = arith.constant 0 : index
    %c0_32 = arith.constant 0 : index
    %56 = vector.load %arg4[%c0_30, %c0_31, %c0_32] : memref<9x2x256xf32, #tpu.memory_space<vmem>>, vector<1x2x256xf32>
    %57 = vector.shape_cast %56 : vector<1x2x256xf32> to vector<2x256xf32>
    %58 = arith.mulf %55, %57 : vector<2x256xf32>
    %59 = arith.addf %54, %58 : vector<2x256xf32>
    %c16_i32 = arith.constant 16 : i32
    %60 = tpu.dynamic_rotate %53 by %c16_i32 dim 1 : vector<2x256xf32>, i32 -> vector<2x256xf32>
    %c1 = arith.constant 1 : index
    %c0_33 = arith.constant 0 : index
    %c0_34 = arith.constant 0 : index
    %61 = vector.load %arg4[%c1, %c0_33, %c0_34] : memref<9x2x256xf32, #tpu.memory_space<vmem>>, vector<1x2x256xf32>
    %62 = vector.shape_cast %61 : vector<1x2x256xf32> to vector<2x256xf32>
    %63 = arith.mulf %60, %62 : vector<2x256xf32>
    %64 = arith.addf %59, %63 : vector<2x256xf32>
    %c15_i32 = arith.constant 15 : i32
    %65 = tpu.dynamic_rotate %53 by %c15_i32 dim 1 : vector<2x256xf32>, i32 -> vector<2x256xf32>
    %c2 = arith.constant 2 : index
    %c0_35 = arith.constant 0 : index
    %c0_36 = arith.constant 0 : index
    %66 = vector.load %arg4[%c2, %c0_35, %c0_36] : memref<9x2x256xf32, #tpu.memory_space<vmem>>, vector<1x2x256xf32>
    %67 = vector.shape_cast %66 : vector<1x2x256xf32> to vector<2x256xf32>
    %68 = arith.mulf %65, %67 : vector<2x256xf32>
    %69 = arith.addf %64, %68 : vector<2x256xf32>
    %c1_i32_37 = arith.constant 1 : i32
    %70 = tpu.dynamic_rotate %53 by %c1_i32_37 dim 1 : vector<2x256xf32>, i32 -> vector<2x256xf32>
    %c3 = arith.constant 3 : index
    %c0_38 = arith.constant 0 : index
    %c0_39 = arith.constant 0 : index
    %71 = vector.load %arg4[%c3, %c0_38, %c0_39] : memref<9x2x256xf32, #tpu.memory_space<vmem>>, vector<1x2x256xf32>
    %72 = vector.shape_cast %71 : vector<1x2x256xf32> to vector<2x256xf32>
    %73 = arith.mulf %70, %72 : vector<2x256xf32>
    %74 = arith.addf %69, %73 : vector<2x256xf32>
    %c4 = arith.constant 4 : index
    %c0_40 = arith.constant 0 : index
    %c0_41 = arith.constant 0 : index
    %75 = vector.load %arg4[%c4, %c0_40, %c0_41] : memref<9x2x256xf32, #tpu.memory_space<vmem>>, vector<1x2x256xf32>
    %76 = vector.shape_cast %75 : vector<1x2x256xf32> to vector<2x256xf32>
    %77 = arith.mulf %53, %76 : vector<2x256xf32>
    %78 = arith.addf %74, %77 : vector<2x256xf32>
    %c255_i32 = arith.constant 255 : i32
    %79 = tpu.dynamic_rotate %53 by %c255_i32 dim 1 : vector<2x256xf32>, i32 -> vector<2x256xf32>
    %c5 = arith.constant 5 : index
    %c0_42 = arith.constant 0 : index
    %c0_43 = arith.constant 0 : index
    %80 = vector.load %arg4[%c5, %c0_42, %c0_43] : memref<9x2x256xf32, #tpu.memory_space<vmem>>, vector<1x2x256xf32>
    %81 = vector.shape_cast %80 : vector<1x2x256xf32> to vector<2x256xf32>
    %82 = arith.mulf %79, %81 : vector<2x256xf32>
    %83 = arith.addf %78, %82 : vector<2x256xf32>
    %c241_i32 = arith.constant 241 : i32
    %84 = tpu.dynamic_rotate %53 by %c241_i32 dim 1 : vector<2x256xf32>, i32 -> vector<2x256xf32>
    %c6 = arith.constant 6 : index
    %c0_44 = arith.constant 0 : index
    %c0_45 = arith.constant 0 : index
    %85 = vector.load %arg4[%c6, %c0_44, %c0_45] : memref<9x2x256xf32, #tpu.memory_space<vmem>>, vector<1x2x256xf32>
    %86 = vector.shape_cast %85 : vector<1x2x256xf32> to vector<2x256xf32>
    %87 = arith.mulf %84, %86 : vector<2x256xf32>
    %88 = arith.addf %83, %87 : vector<2x256xf32>
    %c240_i32 = arith.constant 240 : i32
    %89 = tpu.dynamic_rotate %53 by %c240_i32 dim 1 : vector<2x256xf32>, i32 -> vector<2x256xf32>
    %c7 = arith.constant 7 : index
    %c0_46 = arith.constant 0 : index
    %c0_47 = arith.constant 0 : index
    %90 = vector.load %arg4[%c7, %c0_46, %c0_47] : memref<9x2x256xf32, #tpu.memory_space<vmem>>, vector<1x2x256xf32>
    %91 = vector.shape_cast %90 : vector<1x2x256xf32> to vector<2x256xf32>
    %92 = arith.mulf %89, %91 : vector<2x256xf32>
    %93 = arith.addf %88, %92 : vector<2x256xf32>
    %c239_i32 = arith.constant 239 : i32
    %94 = tpu.dynamic_rotate %53 by %c239_i32 dim 1 : vector<2x256xf32>, i32 -> vector<2x256xf32>
    %c8 = arith.constant 8 : index
    %c0_48 = arith.constant 0 : index
    %c0_49 = arith.constant 0 : index
    %95 = vector.load %arg4[%c8, %c0_48, %c0_49] : memref<9x2x256xf32, #tpu.memory_space<vmem>>, vector<1x2x256xf32>
    %96 = vector.shape_cast %95 : vector<1x2x256xf32> to vector<2x256xf32>
    %97 = arith.mulf %94, %96 : vector<2x256xf32>
    %98 = arith.addf %93, %97 : vector<2x256xf32>
    %cst_50 = arith.constant dense<0.000000e+00> : vector<256xf32>
    %99 = vector.multi_reduction <add>, %98, %cst_50 [0] : vector<2x256xf32> to vector<256xf32>
    %100 = vector.shape_cast %99 : vector<256xf32> to vector<1x256xf32>
    %cst_51 = arith.constant 0.000000e+00 : f32
    %101 = vector.broadcast %cst_51 : f32 to vector<1x256xf32>
    %102 = arith.subf %101, %100 : vector<1x256xf32>
    %103 = math.exp %102 : vector<1x256xf32>
    %cst_52 = arith.constant 1.000000e+00 : f32
    %104 = vector.broadcast %cst_52 : f32 to vector<1x256xf32>
    %105 = arith.addf %104, %103 : vector<1x256xf32>
    %106 = tpu.reciprocal %105 {approx = true} : vector<1x256xf32> -> vector<1x256xf32>
    %c0_53 = arith.constant 0 : index
    %c0_54 = arith.constant 0 : index
    %107 = vector.load %arg7[%c0_53, %c0_54] : memref<1x256xf32, #tpu.memory_space<vmem>>, vector<1x256xf32>
    tpu.vector_store %arg7[%c0_53, %c0_54], %106 {strides = array<i32>} : memref<1x256xf32, #tpu.memory_space<vmem>>, vector<1x256xf32>,
    %c0_i32_55 = arith.constant 0 : i32
    %c1_i32_56 = arith.constant 1 : i32
    %108 = arith.muli %c0_i32_55, %c1_i32_56 : i32
    %c0_i32_57 = arith.constant 0 : i32
    %109 = arith.addi %c0_i32_57, %108 : i32
    %c256_i32_58 = arith.constant 256 : i32
    %110 = arith.muli %109, %c256_i32_58 : i32
    %111 = tpu.assume_multiple %110, 128 : i32
    %c0_59 = arith.constant 0 : index
    %c0_60 = arith.constant 0 : index
    %112 = arith.index_cast %111 : i32 to index
    %113 = vector.load %arg5[%c0_59, %c0_60, %112] : memref<1x4x256xf32, #tpu.memory_space<vmem>>, vector<1x4x256xf32>
    %114 = vector.shape_cast %113 : vector<1x4x256xf32> to vector<4x256xf32>
    %c0_61 = arith.constant 0 : index
    %115 = arith.index_cast %111 : i32 to index
    %116 = vector.load %arg7[%c0_61, %115] : memref<1x256xf32, #tpu.memory_space<vmem>>, vector<1x256xf32>
    %117 = vector.broadcast %116 : vector<1x256xf32> to vector<4x256xf32>
    %118 = arith.mulf %114, %117 : vector<4x256xf32>
    %c0_62 = arith.constant 0 : index
    %c0_63 = arith.constant 0 : index
    %119 = arith.index_cast %111 : i32 to index
    %120 = vector.load %arg5[%c0_62, %c0_63, %119] : memref<1x4x256xf32, #tpu.memory_space<vmem>>, vector<1x4x256xf32>
    %121 = vector.shape_cast %120 : vector<1x4x256xf32> to vector<4x256xf32>
    %122 = vector.shape_cast %118 : vector<4x256xf32> to vector<1x4x256xf32>
    tpu.vector_store %arg5[%c0_62, %c0_63, %119], %122 {strides = array<i32>} : memref<1x4x256xf32, #tpu.memory_space<vmem>>, vector<1x4x256xf32>,
    %c1_i32_64 = arith.constant 1 : i32
    return
  }
  func.func @transform_0(%arg0: i32) -> (i32, i32, i32) {
    %c0_i32 = arith.constant 0 : i32
    %c0_i32_0 = arith.constant 0 : i32
    %c0_i32_1 = arith.constant 0 : i32
    return %arg0, %c0_i32, %c0_i32_0 : i32, i32, i32
  }
  func.func @transform_1(%arg0: i32) -> (i32, i32) {
    %c0_i32 = arith.constant 0 : i32
    %c0_i32_0 = arith.constant 0 : i32
    %c0_i32_1 = arith.constant 0 : i32
    return %c0_i32, %c0_i32_0 : i32, i32
  }
  func.func @transform_2(%arg0: i32) -> (i32, i32) {
    %c0_i32 = arith.constant 0 : i32
    %c0_i32_0 = arith.constant 0 : i32
    %c0_i32_1 = arith.constant 0 : i32
    return %c0_i32, %c0_i32_0 : i32, i32
  }
  func.func @transform_3(%arg0: i32) -> (i32, i32, i32) {
    %c0_i32 = arith.constant 0 : i32
    %c0_i32_0 = arith.constant 0 : i32
    %c0_i32_1 = arith.constant 0 : i32
    %c0_i32_2 = arith.constant 0 : i32
    return %c0_i32, %c0_i32_0, %c0_i32_1 : i32, i32, i32
  }
  func.func @transform_4(%arg0: i32) -> (i32, i32, i32) {
    %c0_i32 = arith.constant 0 : i32
    %c0_i32_0 = arith.constant 0 : i32
    %c0_i32_1 = arith.constant 0 : i32
    return %arg0, %c0_i32, %c0_i32_0 : i32, i32, i32
  }
}

</mosaic_0001>

<llo_original>
// kernel: tpu_custom_call.1
$region0: #{tpu_custom_call.1}
  #allocation0 [shape = 'u32[]', space=smem, size = 0x4, offset = 0x4, fixed_abs, tag = 'smem constant byte address 0x4 - core index']
  #allocation1 [shape = 'u32[72,128]{1,0:T(1,128)}', space=vmem, size = 0x9000, scoped, tag = 'internal scratch']
  #allocation2 [shape = 'f32[2,256]{1,0:T(2,128)}', space=vmem, size = 0x800, scoped, tag = 'scratch operand']
  #allocation3 [shape = 'f32[1,256]{1,0:T(1,128)}', space=vmem, size = 0x400, scoped, tag = 'scratch operand']
  %s0 = inlined_call_operand.hbm [shape: bf16[2,4,256], index: 0, kind: input, shape index: {}]
  %s1 = inlined_call_operand.vmem [shape: bf16[2,4], index: 1, kind: input, shape index: {}]
  %s2 = inlined_call_operand.vmem [shape: bf16[4,2], index: 2, kind: input, shape index: {}]
  %s3 = inlined_call_operand.hbm [shape: f32[9,2,256], index: 3, kind: input, shape index: {}]
  %s4 = inlined_call_operand.hbm [shape: f32[2,4,256], index: 4, kind: output, shape index: {}]
  %s5 = sld [smem:[#allocation0]]
  $region57: #{tpu_custom_call.1} parent=0
    _
  %s7 = ssub.s32 1, %s5
  %s8 = scalar_select 0, %s7, %s5
  $region1: #{tpu_custom_call.1} parent=0
    #allocation4 [shape = 'u8[4096]{0}', space=vmem, size = 0x1000, scoped, tag = 'input window, operand 0']
    #allocation5 [shape = 's32[2]{0}', space=sflag, size = 0x8, scoped, tag = 'scoped memory for tpu_custom_call.1']
    #allocation6 [shape = 's32[2]{0}', space=sflag, size = 0x8, scoped, tag = 'scoped memory for tpu_custom_call.1']
    #allocation7 [shape = 'u8[18432]{0}', space=vmem, size = 0x4800, scoped, tag = 'input window, operand 3, single buffered']
    #allocation8 [shape = 's32[1]{0}', space=sflag, size = 0x4, scoped, tag = 'scoped memory for tpu_custom_call.1']
    #allocation9 [shape = 'u8[8192]{0}', space=vmem, size = 0x2000, scoped, tag = 'output window, operand 0']
    %9 = vsyncpa [#allocation5], 0
    %s10 = scalar_lea.sflag [#allocation5], 1
    %11 = vsyncpa %s10, 0
    %12 = vsyncpa [#allocation8], 0
    %13 = vsyncpa [#allocation6], 0
    %s14 = scalar_lea.sflag [#allocation6], 1
    %15 = vsyncpa %s14, 0
    loop: start=0, step=1, limit=4
    $region2: #{tpu_custom_call.1} parent=1 // loop_pre_header
      _
    $region3: #{tpu_custom_call.1} parent=1 // loop_header
      %s17 = sphi 0, %s21
      %p18 = scmp.ge.s32.totalorder %s17, 4
      %s27 = sphi 0, %s29
      %s30 = sphi 0, %s27
      %s31 = sphi 0, %s30
      %s47 = sphi 0, %s31
      %s51 = sphi 0, %s51
      %s53 = sphi 0, %s51
      %s54 = sphi 0, %s53
      %s68 = sphi 0, %s54
      %s72 = sphi 0, %s72
      %s74 = sphi 0, %s72
      %s75 = sphi 0, %s74
      %s89 = sphi 0, %s75
      %s93 = sphi 0, %s93
      %s95 = sphi 0, %s93
      %s96 = sphi 0, %s95
      %s110 = sphi 0, %s96
      %s116 = sphi 0, %s118
      %s119 = sphi 0, %s116
      %s120 = sphi 0, %s119
      %s136 = sphi 0, %s120
    $region4: #{tpu_custom_call.1} parent=1 // loop_header_branch
      %20 = sbr.rel (%p18) target = $region8
    $region5: #{tpu_custom_call.1} parent=1 // loop_body
      %s22 = ssub.s32 %s17, 1
      %s23 = ssub.s32 %s17, 2
      %s24 = sadd.s32 %s17, 1
      %s25 = ssub.s32 %s17, %s24
      %p26 = scmp.eq.s32.totalorder %s25, 0
      %s28 = sadd.s32 %s27, 1
      %s29 = scalar_select %p26, %s27, %s28
      %p32 = pneg %p26
      %p33 = scmp.eq.s32.totalorder %s17, 1
      %p34 = por %p32, %p33
      %p35 = scmp.ne.s32.totalorder %s27, %s30
      %p36 = scmp.eq.s32.totalorder %s17, 0
      %p37 = por %p35, %p36
      %p38 = scmp.ne.s32.totalorder %s27, %s30
      %p39 = scmp.eq.s32.totalorder %s22, 1
      %p40 = por %p38, %p39
      %p41 = scmp.ne.s32.totalorder %s30, %s31
      %p42 = scmp.eq.s32.totalorder %s22, 0
      %p43 = por %p41, %p42
      %p44 = scmp.ne.s32.totalorder %s30, %s31
      %p45 = scmp.eq.s32.totalorder %s23, 1
      %p46 = por %p44, %p45
      %p48 = scmp.ne.s32.totalorder %s31, %s47
      %p49 = scmp.eq.s32.totalorder %s23, 0
      %p50 = por %p48, %p49
      %s52 = sadd.s32 %s51, 1
      %p55 = scmp.eq.s32.totalorder %s17, 1
      %p56 = scmp.ne.s32.totalorder %s51, %s53
      %p57 = scmp.eq.s32.totalorder %s17, 0
      %p58 = por %p56, %p57
      %p59 = scmp.ne.s32.totalorder %s51, %s53
      %p60 = scmp.eq.s32.totalorder %s22, 1
      %p61 = por %p59, %p60
      %p62 = scmp.ne.s32.totalorder %s53, %s54
      %p63 = scmp.eq.s32.totalorder %s22, 0
      %p64 = por %p62, %p63
      %p65 = scmp.ne.s32.totalorder %s53, %s54
      %p66 = scmp.eq.s32.totalorder %s23, 1
      %p67 = por %p65, %p66
      %p69 = scmp.ne.s32.totalorder %s54, %s68
      %p70 = scmp.eq.s32.totalorder %s23, 0
      %p71 = por %p69, %p70
      %s73 = sadd.s32 %s72, 1
      %p76 = scmp.eq.s32.totalorder %s17, 1
      %p77 = scmp.ne.s32.totalorder %s72, %s74
      %p78 = scmp.eq.s32.totalorder %s17, 0
      %p79 = por %p77, %p78
      %p80 = scmp.ne.s32.totalorder %s72, %s74
      %p81 = scmp.eq.s32.totalorder %s22, 1
      %p82 = por %p80, %p81
      %p83 = scmp.ne.s32.totalorder %s74, %s75
      %p84 = scmp.eq.s32.totalorder %s22, 0
      %p85 = por %p83, %p84
      %p86 = scmp.ne.s32.totalorder %s74, %s75
      %p87 = scmp.eq.s32.totalorder %s23, 1
      %p88 = por %p86, %p87
      %p90 = scmp.ne.s32.totalorder %s75, %s89
      %p91 = scmp.eq.s32.totalorder %s23, 0
      %p92 = por %p90, %p91
      %s94 = sadd.s32 %s93, 1
      %p97 = scmp.eq.s32.totalorder %s17, 1
      %p98 = scmp.ne.s32.totalorder %s93, %s95
      %p99 = scmp.eq.s32.totalorder %s17, 0
      %p100 = por %p98, %p99
      %p101 = scmp.ne.s32.totalorder %s93, %s95
      %p102 = scmp.eq.s32.totalorder %s22, 1
      %p103 = por %p101, %p102
      %p104 = scmp.ne.s32.totalorder %s95, %s96
      %p105 = scmp.eq.s32.totalorder %s22, 0
      %p106 = por %p104, %p105
      %p107 = scmp.ne.s32.totalorder %s95, %s96
      %p108 = scmp.eq.s32.totalorder %s23, 1
      %p109 = por %p107, %p108
      %p111 = scmp.ne.s32.totalorder %s96, %s110
      %p112 = scmp.eq.s32.totalorder %s23, 0
      %p113 = por %p111, %p112
      %s114 = ssub.s32 %s17, %s24
      %p115 = scmp.eq.s32.totalorder %s114, 0
      %s117 = sadd.s32 %s116, 1
      %s118 = scalar_select %p115, %s116, %s117
      %p121 = pneg %p115
      %p122 = scmp.eq.s32.totalorder %s17, 1
      %p123 = por %p121, %p122
      %p124 = scmp.ne.s32.totalorder %s116, %s119
      %p125 = scmp.eq.s32.totalorder %s17, 0
      %p126 = por %p124, %p125
      %p127 = scmp.ne.s32.totalorder %s116, %s119
      %p128 = scmp.eq.s32.totalorder %s22, 1
      %p129 = por %p127, %p128
      %p130 = scmp.ne.s32.totalorder %s119, %s120
      %p131 = scmp.eq.s32.totalorder %s22, 0
      %p132 = por %p130, %p131
      %p133 = scmp.ne.s32.totalorder %s119, %s120
      %p134 = scmp.eq.s32.totalorder %s23, 1
      %p135 = por %p133, %p134
      %p137 = scmp.ne.s32.totalorder %s120, %s136
      %p138 = scmp.eq.s32.totalorder %s23, 0
      %p139 = por %p137, %p138
      %p140 = scmp.le.s32.totalorder 1, %s17
      %p141 = scmp.lt.s32.totalorder %s17, 3
      %p142 = pnand %p140, %p141
      %p143 = pneg %p142
      // Predicated region
      $region9: #{tpu_custom_call.1} parent=5 // pred_check
        _
      $region10: #{tpu_custom_call.1} parent=5 // pred_check_branch
        %145 = sbr.rel (%p142) target = $region12
      $region11: #{tpu_custom_call.1} parent=5 // pred_region
        %s146 = ssub.s32 %s17, 1
        // Predicated region
        $region13: #{tpu_custom_call.1} parent=11 // pred_check
          %p147 = pneg %p64
        $region14: #{tpu_custom_call.1} parent=11 // pred_check_branch
          %149 = sbr.rel (%p147) target = $region16
        $region15: #{tpu_custom_call.1} parent=11 // pred_region
          _
        $region16: #{tpu_custom_call.1} parent=11 // pred_fallthru
          _
        // Predicated region
        $region17: #{tpu_custom_call.1} parent=11 // pred_check
          %p150 = pneg %p85
        $region18: #{tpu_custom_call.1} parent=11 // pred_check_branch
          %152 = sbr.rel (%p150) target = $region20
        $region19: #{tpu_custom_call.1} parent=11 // pred_region
          _
        $region20: #{tpu_custom_call.1} parent=11 // pred_fallthru
          _
        // Predicated region
        $region21: #{tpu_custom_call.1} parent=11 // pred_check
          %p153 = pneg %p106
        $region22: #{tpu_custom_call.1} parent=11 // pred_check_branch
          %155 = sbr.rel (%p153) target = $region24
        $region23: #{tpu_custom_call.1} parent=11 // pred_region
          %157 = vsyncadd [#allocation8], 0
          %s158 = sshll.u32 %s3, 4
          %s159 = int_to_ptr.hbm [resolvable:$true] %s158
          %s160 = sshll.u32 [#allocation7], 4
          %s161 = int_to_ptr.vmem [resolvable:$true] %s160
          %166 = dma.hbm_to_vmem [thread:$0]  %s159, 576, %s161, [#allocation8], 64, 64, 4
        $region24: #{tpu_custom_call.1} parent=11 // pred_fallthru
          _
      $region12: #{tpu_custom_call.1} parent=5 // pred_fallthru
        _
      %p167 = scmp.lt.s32.totalorder %s17, 2
      // Predicated region
      $region25: #{tpu_custom_call.1} parent=5 // pred_check
        %p168 = pneg %p167
      $region26: #{tpu_custom_call.1} parent=5 // pred_check_branch
        %170 = sbr.rel (%p168) target = $region28
      $region27: #{tpu_custom_call.1} parent=5 // pred_region
        // Predicated region
        $region29: #{tpu_custom_call.1} parent=27 // pred_check
          %p171 = pneg %p37
        $region30: #{tpu_custom_call.1} parent=27 // pred_check_branch
          %173 = sbr.rel (%p171) target = $region32
        $region31: #{tpu_custom_call.1} parent=27 // pred_region
          %s174 = sand.u32 %s27, 1
          %s175 = scalar_lea.sflag [#allocation5], %s174
          %s176 = sand.u32 %s27, 1
          %s177 = smul.addr %s176, 4
          %s178 = scalar_lea.vmem [#allocation4], %s177
          %180 = vsyncadd %s175, 0
          %s181 = smul.addr %s17, 2
          %s182 = smul.addr %s181, 2
          %s183 = scalar_lea.hbm %s0, %s182
          %s185 = sshll.u32 %s183, 4
          %s186 = int_to_ptr.hbm [resolvable:$true] %s185
          %s187 = sshll.u32 %s178, 4
          %s188 = int_to_ptr.vmem [resolvable:$true] %s187
          %190 = dma.hbm_to_vmem [thread:$0]  %s186, 64, %s188, %s175
        $region32: #{tpu_custom_call.1} parent=27 // pred_fallthru
          _
      $region28: #{tpu_custom_call.1} parent=5 // pred_fallthru
        _
      %p191 = scmp.le.s32.totalorder 1, %s17
      %p192 = scmp.lt.s32.totalorder %s17, 3
      %p193 = pnand %p191, %p192
      %p194 = pneg %p193
      // Predicated region
      $region33: #{tpu_custom_call.1} parent=5 // pred_check
        _
      $region34: #{tpu_custom_call.1} parent=5 // pred_check_branch
        %196 = sbr.rel (%p193) target = $region36
      $region35: #{tpu_custom_call.1} parent=5 // pred_region
        %s197 = ssub.s32 %s17, 1
        %s198 = sand.u32 %s30, 1
        %s199 = scalar_lea.sflag [#allocation5], %s198
        %s200 = sand.u32 %s30, 1
        %s201 = smul.addr %s200, 4
        %s202 = scalar_lea.vmem [#allocation4], %s201
        // Predicated region
        $region37: #{tpu_custom_call.1} parent=35 // pred_check
          %p203 = pneg %p43
        $region38: #{tpu_custom_call.1} parent=35 // pred_check_branch
          %205 = sbr.rel (%p203) target = $region40
        $region39: #{tpu_custom_call.1} parent=35 // pred_region
          %207 = dma.done %s199, 64
        $region40: #{tpu_custom_call.1} parent=35 // pred_fallthru
          _
        // Predicated region
        $region41: #{tpu_custom_call.1} parent=35 // pred_check
          %p208 = pneg %p106
        $region42: #{tpu_custom_call.1} parent=35 // pred_check_branch
          %210 = sbr.rel (%p208) target = $region44
        $region43: #{tpu_custom_call.1} parent=35 // pred_region
          %212 = dma.done [#allocation8], 576
        $region44: #{tpu_custom_call.1} parent=35 // pred_fallthru
          _
        %s213 = sand.u32 %s30, 1
        %s214 = scalar_lea.sflag [#allocation5], %s213
        %s215 = sand.u32 %s30, 1
        %s216 = smul.addr %s215, 4
        %s217 = scalar_lea.vmem [#allocation4], %s216
        %p218 = pneg %p43
        %p219 = pneg %p40
        %p220 = pneg %p64
        %p221 = pneg %p61
        %p222 = pneg %p85
        %p223 = pneg %p82
        %p224 = pneg %p106
        %p225 = pneg %p103
        %p226 = pneg %p132
        %p227 = pneg %p129
        %s228 = sand.u32 %s119, 1
        %s229 = scalar_lea.sflag [#allocation6], %s228
        %s230 = sand.u32 %s119, 1
        %s231 = smul.addr %s230, 8
        %s232 = scalar_lea.vmem [#allocation9], %s231
        %v234 = vld [vmem:[%s1] sm:$0x1]
        %v235 = vld [vmem:[%s2] sm:$0x3]
        %v236 = vld [vmem:[%s202] sm:$0xf]
        %238 = vst [vmem:[#allocation1] ss:$4 sm:$0xff] %v236
        %v239 = vld.sshfl [vmem:[#allocation1] sm:$0xff pattern:$0x73625140]
        %v240 = vld.sshfl [vmem:[#allocation1 + $0x8] sm:$0xff pattern:$0x73625140]
        %vm241 = vcmask 31744
        %v243 = vsel %vm241, %v234, 0
        %vm245 = vcmask 1041408
        %v246 = vsel %vm245, %v239, 0
        %v248 = vsel %vm245, %v240, 0
        %250 = vmatpush.bf16.msra.mxu0 0
        %251 = vmatpush.bf16.msra.mxu0 0
        %252 = vmatpush.bf16.msra.mxu0 0
        %253 = vmatpush.bf16.msra.mxu0 0
        %254 = vmatpush.bf16.msra.mxu0 0
        %255 = vmatpush.bf16.msra.mxu0 0
        %256 = vmatpush.bf16.msra.mxu0 0
        %257 = vmatpush.bf16.msra.mxu0 %v246
        %258 = vmatmul.bf16.gmra.mxu0 %v243
        %v259 = vpop.f32.mrf.mxu0
        %v260 = vadd.f32 0.0, %v259
        %v261 = vpop.f32.mrf.mxu0
        %262 = vdwg.mxu0
        %263 = vmatpush.bf16.msra.mxu0 0
        %264 = vmatpush.bf16.msra.mxu0 0
        %265 = vmatpush.bf16.msra.mxu0 0
        %266 = vmatpush.bf16.msra.mxu0 0
        %267 = vmatpush.bf16.msra.mxu0 0
        %268 = vmatpush.bf16.msra.mxu0 0
        %269 = vmatpush.bf16.msra.mxu0 0
        %270 = vmatpush.bf16.msra.mxu0 %v248
        %271 = vmatmul.bf16.gmra.mxu0 %v243
        %v272 = vpop.f32.mrf.mxu0
        %v273 = vadd.f32 0.0, %v272
        %v274 = vpop.f32.mrf.mxu0
        %275 = vdwg.mxu0
        %v276 = vmax.f32 %v260, 0.0
        %v277 = vmax.f32 %v273, 0.0
        %v278 = vpack.c.bf16 %v276, %v276
        %v279 = vpack.c.bf16 %v277, %v277
        %vm280 = vcmask 15360
        %v282 = vsel %vm280, %v235, 0
        %vm284 = vcmask 1040384
        %v286 = vsel %vm284, %v278, 0
        %v289 = vsel %vm284, %v279, 0
        %291 = vmatpush.bf16.msra.mxu0 0
        %292 = vmatpush.bf16.msra.mxu0 0
        %293 = vmatpush.bf16.msra.mxu0 0
        %294 = vmatpush.bf16.msra.mxu0 0
        %295 = vmatpush.bf16.msra.mxu0 0
        %296 = vmatpush.bf16.msra.mxu0 0
        %297 = vmatpush.bf16.msra.mxu0 0
        %298 = vmatpush.bf16.msra.mxu0 %v286
        %299 = vmatmul.bf16.gmra.mxu0 %v282
        %v300 = vpop.f32.mrf.mxu0
        %v301 = vadd.f32 0.0, %v300
        %v302 = vpop.f32.mrf.mxu0
        %303 = vdwg.mxu0
        %304 = vmatpush.bf16.msra.mxu0 0
        %305 = vmatpush.bf16.msra.mxu0 0
        %306 = vmatpush.bf16.msra.mxu0 0
        %307 = vmatpush.bf16.msra.mxu0 0
        %308 = vmatpush.bf16.msra.mxu0 0
        %309 = vmatpush.bf16.msra.mxu0 0
        %310 = vmatpush.bf16.msra.mxu0 0
        %311 = vmatpush.bf16.msra.mxu0 %v289
        %312 = vmatmul.bf16.gmra.mxu0 %v282
        %v313 = vpop.f32.mrf.mxu0
        %v314 = vadd.f32 0.0, %v313
        %v315 = vpop.f32.mrf.mxu0
        %316 = vdwg.mxu0
        %vm317 = vcmask 1043456
        %v318 = vsel %vm317, %v301, -inf
        %v319 = vsel %vm317, %v314, -inf
        %v320 = vmax.f32 %v318, %v319
        %321 = vmax.xlane.f32.xlu0 %v320
        %v322 = vpop.xlane.xlu0 %321
        %v323 = vsel %vm317, %v301, 0.0
        %v324 = vsel %vm317, %v314, 0.0
        %v325 = vadd.f32 %v323, %v324
        %326 = vadd.xlane.f32.xlu0 %v325
        %v327 = vpop.xlane.xlu0 %326
        %v328 = vadd.f32 %v327, 0.0
        %v329 = vmul.f32 %v328, 0.00390625
        %v330 = vadd.f32 %v322, %v329
        %v331 = vsub.f32 0.0, %v330
        %v332 = vmul.f32 %v331, 1.442695
        %v333 = vpow.pop %v332
        %v334 = vadd.f32 %v333, 1.0
        %v335 = vrcp.pop %v334
        %v336 = vunpack.c.l.bf16 %v236
        %338 = vst [vmem:[#allocation1] ss:$2 sm:$0xff] %v336
        %v339 = vld.sshfl [vmem:[#allocation1] sm:$0xff pattern:$0x75316420]
        %v340 = vld.sshfl [vmem:[#allocation1 + $0x8] sm:$0xff pattern:$0x75316420]
        %v343 = vmul.f32 %v335, %v339
        %v344 = vmul.f32 %v335, %v340
        %v347 = vrot.slane %v344, 4
        %v348 = vsel %vm317, %v343, %v347
        %350 = vst [vmem:[%s232] sm:$0xff] %v348
        %v351 = vsel %vm317, %v343, -inf
        %v352 = vrot.slane %v351, 4
        %v353 = vmax.f32 %v351, %v352
        %v354 = vrot.slane %v353, 2
        %v355 = vmax.f32 %v353, %v354
        %v356 = vrot.slane %v355, 1
        %v357 = vmax.f32 %v355, %v356
        %v358 = vsel %vm317, %v344, -inf
        %v359 = vrot.slane %v358, 4
        %v360 = vmax.f32 %v358, %v359
        %v361 = vrot.slane %v360, 2
        %v362 = vmax.f32 %v360, %v361
        %v363 = vrot.slane %v362, 1
        %v364 = vmax.f32 %v362, %v363
        %v365 = vsel %vm317, %v343, 0.0
        %v366 = vrot.slane %v365, 4
        %v367 = vadd.f32 %v365, %v366
        %v368 = vrot.slane %v367, 2
        %v369 = vadd.f32 %v367, %v368
        %v370 = vrot.slane %v369, 1
        %v371 = vadd.f32 %v369, %v370
        %v372 = vsel %vm317, %v344, 0.0
        %v373 = vrot.slane %v372, 4
        %v374 = vadd.f32 %v372, %v373
        %v375 = vrot.slane %v374, 2
        %v376 = vadd.f32 %v374, %v375
        %v377 = vrot.slane %v376, 1
        %v378 = vadd.f32 %v376, %v377
        %v379 = vmul.f32 %v371, 0.25
        %v380 = vmul.f32 %v378, 0.25
        %v381 = vsel %vm284, %v357, %v379
        %v382 = vsel %vm284, %v364, %v380
        %v385 = vrot.slane %v382, 6
        %v386 = vsel %vm245, %v381, %v385
        %388 = vst [vmem:[#allocation2] sm:$0xf] %v386
        %v389 = vld [vmem:[#allocation2] sm:$0xf]
        %391 = vst [vmem:[#allocation1] ss:$4 sm:$0xff] %v389
        %v392 = vld.sshfl [vmem:[#allocation1] sm:$0xff pattern:$0x73625140]
        %v393 = vld.sshfl [vmem:[#allocation1 + $0x8] sm:$0xff pattern:$0x73625140]
        %396 = vrot.lane.b32.xlu0 %v392, 17
        %v397 = vpop.permute.xlu0 %396
        %398 = vrot.lane.b32.xlu0 %v393, 17
        %v399 = vpop.permute.xlu0 %398
        %v400 = vlaneseq
        %v401 = vand.u32 %v400, 127
        %vm402 = vcmp.lt.s32.totalorder %v401, 17
        %v403 = vsel %vm402, %v397, %v399
        %v404 = vsel %vm402, %v399, %v397
        %v405 = vld [vmem:[#allocation7] sm:$0xf]
        %407 = vst [vmem:[#allocation1] ss:$4 sm:$0xff] %v405
        %v408 = vld.sshfl [vmem:[#allocation1] sm:$0xff pattern:$0x73625140]
        %v409 = vld.sshfl [vmem:[#allocation1 + $0x8] sm:$0xff pattern:$0x73625140]
        %v412 = vmul.f32 %v404, %v408
        %v413 = vmul.f32 %v403, %v409
        %v414 = vadd.f32 %v412, 0.0
        %v415 = vadd.f32 %v413, 0.0
        %416 = vst [vmem:[#allocation1] ss:$4 sm:$0xff] %v389
        %v417 = vld.sshfl [vmem:[#allocation1] sm:$0xff pattern:$0x73625140]
        %v418 = vld.sshfl [vmem:[#allocation1 + $0x8] sm:$0xff pattern:$0x73625140]
        %421 = vrot.lane.b32.xlu0 %v417, 16
        %v422 = vpop.permute.xlu0 %421
        %423 = vrot.lane.b32.xlu0 %v418, 16
        %v424 = vpop.permute.xlu0 %423
        %vm425 = vcmp.lt.s32.totalorder %v401, 16
        %v426 = vsel %vm425, %v422, %v424
        %v427 = vsel %vm425, %v424, %v422
        %s428 = scalar_lea.vmem [#allocation7], 4
        %v429 = vld [vmem:[%s428] sm:$0xf]
        %431 = vst [vmem:[#allocation1] ss:$4 sm:$0xff] %v429
        %v432 = vld.sshfl [vmem:[#allocation1] sm:$0xff pattern:$0x73625140]
        %v433 = vld.sshfl [vmem:[#allocation1 + $0x8] sm:$0xff pattern:$0x73625140]
        %v436 = vmul.f32 %v427, %v432
        %v437 = vmul.f32 %v426, %v433
        %v438 = vadd.f32 %v414, %v436
        %v439 = vadd.f32 %v415, %v437
        %440 = vst [vmem:[#allocation1] ss:$4 sm:$0xff] %v389
        %v441 = vld.sshfl [vmem:[#allocation1] sm:$0xff pattern:$0x73625140]
        %v442 = vld.sshfl [vmem:[#allocation1 + $0x8] sm:$0xff pattern:$0x73625140]
        %445 = vrot.lane.b32.xlu0 %v441, 15
        %v446 = vpop.permute.xlu0 %445
        %447 = vrot.lane.b32.xlu0 %v442, 15
        %v448 = vpop.permute.xlu0 %447
        %vm449 = vcmp.lt.s32.totalorder %v401, 15
        %v450 = vsel %vm449, %v446, %v448
        %v451 = vsel %vm449, %v448, %v446
        %s452 = scalar_lea.vmem [#allocation7], 8
        %v453 = vld [vmem:[%s452] sm:$0xf]
        %455 = vst [vmem:[#allocation1] ss:$4 sm:$0xff] %v453
        %v456 = vld.sshfl [vmem:[#allocation1] sm:$0xff pattern:$0x73625140]
        %v457 = vld.sshfl [vmem:[#allocation1 + $0x8] sm:$0xff pattern:$0x73625140]
        %v460 = vmul.f32 %v451, %v456
        %v461 = vmul.f32 %v450, %v457
        %v462 = vadd.f32 %v438, %v460
        %v463 = vadd.f32 %v439, %v461
        %464 = vst [vmem:[#allocation1] ss:$4 sm:$0xff] %v389
        %v465 = vld.sshfl [vmem:[#allocation1] sm:$0xff pattern:$0x73625140]
        %v466 = vld.sshfl [vmem:[#allocation1 + $0x8] sm:$0xff pattern:$0x73625140]
        %469 = vrot.lane.b32.xlu0 %v465, 1
        %v470 = vpop.permute.xlu0 %469
        %471 = vrot.lane.b32.xlu0 %v466, 1
        %v472 = vpop.permute.xlu0 %471
        %vm473 = vcmp.lt.s32.totalorder %v401, 1
        %v474 = vsel %vm473, %v470, %v472
        %v475 = vsel %vm473, %v472, %v470
        %s476 = scalar_lea.vmem [#allocation7], 12
        %v477 = vld [vmem:[%s476] sm:$0xf]
        %479 = vst [vmem:[#allocation1] ss:$4 sm:$0xff] %v477
        %v480 = vld.sshfl [vmem:[#allocation1] sm:$0xff pattern:$0x73625140]
        %v481 = vld.sshfl [vmem:[#allocation1 + $0x8] sm:$0xff pattern:$0x73625140]
        %v484 = vmul.f32 %v475, %v480
        %v485 = vmul.f32 %v474, %v481
        %v486 = vadd.f32 %v462, %v484
        %v487 = vadd.f32 %v463, %v485
        %s488 = scalar_lea.vmem [#allocation7], 16
        %v489 = vld [vmem:[%s488] sm:$0xf]
        %v490 = vmul.f32 %v389, %v489
        %492 = vst [vmem:[#allocation1] ss:$4 sm:$0xff] %v490
        %v493 = vld.sshfl [vmem:[#allocation1] sm:$0xff pattern:$0x73625140]
        %v494 = vld.sshfl [vmem:[#allocation1 + $0x8] sm:$0xff pattern:$0x73625140]
        %v497 = vadd.f32 %v486, %v493
        %v498 = vadd.f32 %v487, %v494
        %499 = vst [vmem:[#allocation1] ss:$4 sm:$0xff] %v389
        %v500 = vld.sshfl [vmem:[#allocation1] sm:$0xff pattern:$0x73625140]
        %v501 = vld.sshfl [vmem:[#allocation1 + $0x8] sm:$0xff pattern:$0x73625140]
        %504 = vrot.lane.b32.xlu0 %v500, 127
        %v505 = vpop.permute.xlu0 %504
        %506 = vrot.lane.b32.xlu0 %v501, 127
        %v507 = vpop.permute.xlu0 %506
        %vm508 = vcmp.lt.s32.totalorder %v401, 127
        %v509 = vsel %vm508, %v505, %v507
        %v510 = vsel %vm508, %v507, %v505
        %s511 = scalar_lea.vmem [#allocation7], 20
        %v512 = vld [vmem:[%s511] sm:$0xf]
        %514 = vst [vmem:[#allocation1] ss:$4 sm:$0xff] %v512
        %v515 = vld.sshfl [vmem:[#allocation1] sm:$0xff pattern:$0x73625140]
        %v516 = vld.sshfl [vmem:[#allocation1 + $0x8] sm:$0xff pattern:$0x73625140]
        %v519 = vmul.f32 %v509, %v515
        %v520 = vmul.f32 %v510, %v516
        %v521 = vadd.f32 %v497, %v519
        %v522 = vadd.f32 %v498, %v520
        %523 = vst [vmem:[#allocation1] ss:$4 sm:$0xff] %v389
        %v524 = vld.sshfl [vmem:[#allocation1] sm:$0xff pattern:$0x73625140]
        %v525 = vld.sshfl [vmem:[#allocation1 + $0x8] sm:$0xff pattern:$0x73625140]
        %528 = vrot.lane.b32.xlu0 %v524, 113
        %v529 = vpop.permute.xlu0 %528
        %530 = vrot.lane.b32.xlu0 %v525, 113
        %v531 = vpop.permute.xlu0 %530
        %vm532 = vcmp.lt.s32.totalorder %v401, 113
        %v533 = vsel %vm532, %v529, %v531
        %v534 = vsel %vm532, %v531, %v529
        %s535 = scalar_lea.vmem [#allocation7], 24
        %v536 = vld [vmem:[%s535] sm:$0xf]
        %538 = vst [vmem:[#allocation1] ss:$4 sm:$0xff] %v536
        %v539 = vld.sshfl [vmem:[#allocation1] sm:$0xff pattern:$0x73625140]
        %v540 = vld.sshfl [vmem:[#allocation1 + $0x8] sm:$0xff pattern:$0x73625140]
        %v543 = vmul.f32 %v533, %v539
        %v544 = vmul.f32 %v534, %v540
        %v545 = vadd.f32 %v521, %v543
        %v546 = vadd.f32 %v522, %v544
        %547 = vst [vmem:[#allocation1] ss:$4 sm:$0xff] %v389
        %v548 = vld.sshfl [vmem:[#allocation1] sm:$0xff pattern:$0x73625140]
        %v549 = vld.sshfl [vmem:[#allocation1 + $0x8] sm:$0xff pattern:$0x73625140]
        %552 = vrot.lane.b32.xlu0 %v548, 112
        %v553 = vpop.permute.xlu0 %552
        %554 = vrot.lane.b32.xlu0 %v549, 112
        %v555 = vpop.permute.xlu0 %554
        %vm556 = vcmp.lt.s32.totalorder %v401, 112
        %v557 = vsel %vm556, %v553, %v555
        %v558 = vsel %vm556, %v555, %v553
        %s559 = scalar_lea.vmem [#allocation7], 28
        %v560 = vld [vmem:[%s559] sm:$0xf]
        %562 = vst [vmem:[#allocation1] ss:$4 sm:$0xff] %v560
        %v563 = vld.sshfl [vmem:[#allocation1] sm:$0xff pattern:$0x73625140]
        %v564 = vld.sshfl [vmem:[#allocation1 + $0x8] sm:$0xff pattern:$0x73625140]
        %v567 = vmul.f32 %v557, %v563
        %v568 = vmul.f32 %v558, %v564
        %v569 = vadd.f32 %v545, %v567
        %v570 = vadd.f32 %v546, %v568
        %571 = vst [vmem:[#allocation1] ss:$4 sm:$0xff] %v389
        %v572 = vld.sshfl [vmem:[#allocation1] sm:$0xff pattern:$0x73625140]
        %v573 = vld.sshfl [vmem:[#allocation1 + $0x8] sm:$0xff pattern:$0x73625140]
        %576 = vrot.lane.b32.xlu0 %v572, 111
        %v577 = vpop.permute.xlu0 %576
        %578 = vrot.lane.b32.xlu0 %v573, 111
        %v579 = vpop.permute.xlu0 %578
        %vm580 = vcmp.lt.s32.totalorder %v401, 111
        %v581 = vsel %vm580, %v577, %v579
        %v582 = vsel %vm580, %v579, %v577
        %s583 = scalar_lea.vmem [#allocation7], 32
        %v584 = vld [vmem:[%s583] sm:$0xf]
        %586 = vst [vmem:[#allocation1] ss:$4 sm:$0xff] %v584
        %v587 = vld.sshfl [vmem:[#allocation1] sm:$0xff pattern:$0x73625140]
        %v588 = vld.sshfl [vmem:[#allocation1 + $0x8] sm:$0xff pattern:$0x73625140]
        %v591 = vmul.f32 %v581, %v587
        %v592 = vmul.f32 %v582, %v588
        %v593 = vadd.f32 %v569, %v591
        %v594 = vadd.f32 %v570, %v592
        %v595 = vsel %vm245, %v593, 0.0
        %v596 = vrot.slane %v595, 4
        %v597 = vadd.f32 %v595, %v596
        %v598 = vrot.slane %v597, 2
        %v599 = vadd.f32 %v597, %v598
        %v600 = vrot.slane %v599, 1
        %v601 = vadd.f32 %v599, %v600
        %v602 = vsel %vm245, %v594, 0.0
        %v603 = vrot.slane %v602, 4
        %v604 = vadd.f32 %v602, %v603
        %v605 = vrot.slane %v604, 2
        %v606 = vadd.f32 %v604, %v605
        %v607 = vrot.slane %v606, 1
        %v608 = vadd.f32 %v606, %v607
        %v609 = vsub.f32 0.0, %v601
        %v610 = vsub.f32 0.0, %v608
        %v611 = vmul.f32 %v609, 1.442695
        %v612 = vpow.pop %v611
        %v613 = vmul.f32 %v610, 1.442695
        %v614 = vpow.pop %v613
        %v615 = vadd.f32 %v612, 1.0
        %v616 = vadd.f32 %v614, 1.0
        %v617 = vrcp.pop %v615
        %v618 = vrcp.pop %v616
        %v621 = vrot.slane %v618, 7
        %v622 = vsel %vm284, %v617, %v621
        %v624 = vlaneseq
        %vm625 = vcmp.ge.s32.totalorder %v624, 0
        %vm626 = vcmp.lt.s32.totalorder %v624, 256
        %vm627 = vmand %vm625, %vm626
        %628 = vst.msk [vmem:[#allocation3] sm:$0x3] %vm627, %v622
        %v629 = vld [vmem:[%s232] sm:$0xff]
        %v630 = vld [vmem:[#allocation3] sm:$0x3]
        %v632 = vperm.slane %v630, 0
        %v633 = vperm.slane %v630, 1
        %v634 = vrot.slane %v633, 4
        %v635 = vsel %vm317, %v632, %v634
        %v637 = vmul.f32 %v629, %v635
        %638 = vst [vmem:[%s232] sm:$0xff] %v637
        %s639 = sand.u32 %s119, 1
        %s640 = scalar_lea.sflag [#allocation6], %s639
        %s641 = sand.u32 %s119, 1
        %s642 = smul.addr %s641, 8
        %s643 = scalar_lea.vmem [#allocation9], %s642
        // Predicated region
        $region45: #{tpu_custom_call.1} parent=35 // pred_check
          %p644 = pneg %p129
        $region46: #{tpu_custom_call.1} parent=35 // pred_check_branch
          %646 = sbr.rel (%p644) target = $region48
        $region47: #{tpu_custom_call.1} parent=35 // pred_region
          %648 = vsyncadd %s640, 0
          %s649 = smul.addr %s22, 2
          %s650 = smul.addr %s649, 4
          %s651 = scalar_lea.hbm %s4, %s650
          %s653 = sshll.u32 %s643, 4
          %s654 = int_to_ptr.vmem [resolvable:$true] %s653
          %s655 = sshll.u32 %s651, 4
          %s656 = int_to_ptr.hbm [resolvable:$true] %s655
          %658 = dma.vmem_to_hbm [thread:$0]  %s654, 128, %s656, %s640
        $region48: #{tpu_custom_call.1} parent=35 // pred_fallthru
          _
      $region36: #{tpu_custom_call.1} parent=5 // pred_fallthru
        _
      %p659 = scmp.le.s32.totalorder 2, %s17
      // Predicated region
      $region49: #{tpu_custom_call.1} parent=5 // pred_check
        %p660 = pneg %p659
      $region50: #{tpu_custom_call.1} parent=5 // pred_check_branch
        %662 = sbr.rel (%p660) target = $region52
      $region51: #{tpu_custom_call.1} parent=5 // pred_region
        %s663 = ssub.s32 %s17, 2
        // Predicated region
        $region53: #{tpu_custom_call.1} parent=51 // pred_check
          %p664 = pneg %p135
        $region54: #{tpu_custom_call.1} parent=51 // pred_check_branch
          %666 = sbr.rel (%p664) target = $region56
        $region55: #{tpu_custom_call.1} parent=51 // pred_region
          %s667 = sand.u32 %s120, 1
          %s668 = scalar_lea.sflag [#allocation6], %s667
          %s669 = sand.u32 %s120, 1
          %s670 = smul.addr %s669, 8
          %s671 = scalar_lea.vmem [#allocation9], %s670
          %673 = dma.done %s668, 128
        $region56: #{tpu_custom_call.1} parent=51 // pred_fallthru
          _
      $region52: #{tpu_custom_call.1} parent=5 // pred_fallthru
        _
    $region6: #{tpu_custom_call.1} parent=1 // loop_footer
      %s21 = sadd.s32 1, %s17
    $region7: #{tpu_custom_call.1} parent=1 // loop_footer_branch
      %16 = sbr.rel target = $region3
    $region8: #{tpu_custom_call.1} parent=1 // loop_exit
      _
    %674 = vsyncpa [#allocation5], 1
    %s675 = scalar_lea.sflag [#allocation5], 1
    %676 = vsyncpa %s675, 1
    %677 = vsyncpa [#allocation8], 1
    %678 = vsyncpa [#allocation6], 1
    %s679 = scalar_lea.sflag [#allocation6], 1
    %680 = vsyncpa %s679, 1

</llo_original>
